<compile_context>
chip_gen: v7x
topology: tpu7x:2x2x1
jax: 0.10.0
libtpu: 0.0.40
codegen_flags: <defaults>
</compile_context>

<pallas_src>
import jax
import jax.numpy as jnp
import numpy as np
from jax.experimental import pallas as pl
from jax.experimental.pallas import tpu as pltpu


def _make_kernel(l_tile, pad, dil, K, Cin, Cout, slope):
    f32 = jnp.float32
    bf16 = jnp.bfloat16
    Lt = l_tile

    def kernel(x_ref, w1_ref, b1_ref, w2_ref, b2_ref, out_ref,
               xcar_ref, hcar_ref):
        # x_ref   : (1, Cin, Lt)     bf16  current L tile (NCL: time on lanes)
        # w1_ref  : (2*Cout, K*Cin)  bf16  conv1 im2col weights; rows [Cout:) are the
        #                                  1x1 downsample folded into the last tap
        # b1_ref  : (2*Cout, 1)      f32   [b1 ; b_downsample]
        # w2_ref  : (Cout, K*Cout)   bf16  conv2 im2col weights
        # b2_ref  : (Cout, 1)        f32
        # out_ref : (1, Cout, Lt)    f32 or bf16
        # xcar_ref: (Cin, pad)       bf16  halo: last `pad` input cols of prev tile
        # hcar_ref: (Cout, pad)      bf16  halo: last `pad` hidden cols of prev tile
        lt = pl.program_id(1)

        @pl.when(lt == 0)
        def _():                                   # causal left boundary: zero history
            xcar_ref[...] = jnp.zeros((Cin, pad), bf16)
            hcar_ref[...] = jnp.zeros((Cout, pad), bf16)

        x = x_ref[0]                                                 # (Cin, Lt) bf16
        xp = jnp.concatenate([xcar_ref[...], x], axis=-1)            # (Cin, Lt+pad) bf16

        # ---- conv1 (dilated causal) + residual 1x1: one fused bf16 MXU matmul ----
        # im2col built in registers (lane shifts + sublane concat -> XLU), no VMEM.
        xim = jnp.concatenate([xp[:, i * dil:i * dil + Lt] for i in range(K)],
                              axis=0)                                # (K*Cin, Lt) bf16
        acc = jnp.dot(w1_ref[...], xim,
                      preferred_element_type=f32) + b1_ref[...]      # (2*Cout, Lt) f32
        a1 = acc[:Cout]
        res = acc[Cout:]                                             # downsample(x)+bd
        h1 = jnp.where(a1 > 0, a1, slope * a1)                       # LeakyReLU, f32
        h1b = h1.astype(bf16)                                        # conv2 operand
        # TODO(synk): Dropout layers are identity in eval/inference mode; no-op here.

        # ---- conv2 (dilated causal): one fused bf16 MXU matmul ----
        hp = jnp.concatenate([hcar_ref[...], h1b], axis=-1)          # (Cout, Lt+pad) bf16
        him = jnp.concatenate([hp[:, i * dil:i * dil + Lt] for i in range(K)],
                              axis=0)                                # (K*Cout, Lt) bf16
        a2 = jnp.dot(w2_ref[...], him,
                     preferred_element_type=f32) + b2_ref[...]       # (Cout, Lt) f32
        h2 = jnp.where(a2 > 0, a2, slope * a2)

        y = h2 + res
        out_ref[0] = jnp.where(y > 0, y, slope * y).astype(out_ref.dtype)

        # ---- carry the causal halo (bf16) to the next (sequential) L tile ----
        xcar_ref[...] = x[:, Lt - pad:]
        hcar_ref[...] = h1b[:, Lt - pad:]

    return kernel


def temporal_block_forward(x_ncl, params, *, kernel_size, dilation,
                           slope=0.01, l_tile=None, out_dtype=jnp.float32,
                           vmem_limit_bytes=None):
    """x_ncl: (N, Cin, L) float32 (PyTorch NCL layout). Returns (N, Cout, L) out_dtype."""
    N, Cin, L = x_ncl.shape
    K, dil = kernel_size, dilation
    pad = (K - 1) * dil

    # weight_norm reparameterization: w = g * v / ||v|| (per out-channel, dim=0)
    def wn(v, g):
        norm = jnp.sqrt(jnp.sum(v * v, axis=(1, 2), keepdims=True))
        return g[:, None, None] * v / norm

    w1 = wn(params["v1"], params["g1"])                  # (Cout, Cin,  K)
    w2 = wn(params["v2"], params["g2"])                  # (Cout, Cout, K)
    Cout = w1.shape[0]
    wd = params["wd"][:, :, 0]                           # (Cout, Cin)

    # im2col weight packing (tap-major along the contraction dim); the residual
    # 1x1 conv is folded into conv1's last tap (its input is exactly x[t]) as
    # `Cout` extra output rows -> one matmul yields conv1 AND the residual path.
    w1_taps = jnp.concatenate([w1[:, :, i] for i in range(K)], axis=1)     # (Cout, K*Cin)
    wd_taps = jnp.concatenate(
        [jnp.zeros((Cout, (K - 1) * Cin), jnp.float32), wd], axis=1)       # (Cout, K*Cin)
    w1_big = jnp.concatenate([w1_taps, wd_taps], axis=0).astype(jnp.bfloat16)
    w2_cat = jnp.concatenate([w2[:, :, i] for i in range(K)], axis=1).astype(jnp.bfloat16)
    b_big = jnp.concatenate([params["b1"], params["bd"]]).reshape(2 * Cout, 1).astype(jnp.float32)
    b2 = params["b2"].reshape(Cout, 1).astype(jnp.float32)

    # L tiling: each tile must be a multiple of 128 lanes or cover all of L.
    # Default 1024 amortizes per-step overhead; at small channel counts VMEM use is
    # tiny.  For large channel counts on v7x (64 MiB VMEM) shrink Lt and/or raise
    # vmem_limit_bytes explicitly (v5e default scoped VMEM is only 16 MiB).
    if l_tile is None:
        l_tile = min(L, 1024) if L % 128 == 0 else L
    assert L % l_tile == 0 and l_tile > pad, (L, l_tile, pad)
    n_lt = L // l_tile

    x_bf = x_ncl.astype(jnp.bfloat16)                    # bf16 input: half HBM bytes

    kernel = _make_kernel(l_tile, pad, dil, K, Cin, Cout, slope)

    return pl.pallas_call(
        kernel,
        out_shape=jax.ShapeDtypeStruct((N, Cout, L), out_dtype),
        grid_spec=pltpu.PrefetchScalarGridSpec(
            num_scalar_prefetch=0,
            grid=(N, n_lt),                              # L axis innermost: halo carry
            in_specs=[
                pl.BlockSpec((1, Cin, l_tile), lambda n, t: (n, 0, t)),
                pl.BlockSpec((2 * Cout, K * Cin), lambda n, t: (0, 0)),
                pl.BlockSpec((2 * Cout, 1), lambda n, t: (0, 0)),
                pl.BlockSpec((Cout, K * Cout), lambda n, t: (0, 0)),
                pl.BlockSpec((Cout, 1), lambda n, t: (0, 0)),
            ],
            out_specs=pl.BlockSpec((1, Cout, l_tile), lambda n, t: (n, 0, t)),
            scratch_shapes=[
                pltpu.VMEM((Cin, pad), jnp.bfloat16),         # x halo carry (bf16)
                pltpu.VMEM((Cout, pad), jnp.bfloat16),        # hidden halo carry (bf16)
            ],
        ),
        compiler_params=pltpu.CompilerParams(
            dimension_semantics=("parallel", "arbitrary"),
            vmem_limit_bytes=vmem_limit_bytes),
    )(x_bf, w1_big, b_big, w2_cat, b2)


def temporal_block_reference(x_ncl, params, *, kernel_size, dilation, slope=0.01):
    """Pure-JAX reference (independent code path). Mirrors the kernel's numerics
    (bf16 matmul operands, f32 accumulation/elementwise) so tolerances stay tight."""
    N, Cin, L = x_ncl.shape
    K, dil = kernel_size, dilation
    pad = (K - 1) * dil

    def wn(v, g):
        norm = jnp.sqrt(jnp.sum(v * v, axis=(1, 2), keepdims=True))
        return g[:, None, None] * v / norm

    w1 = wn(params["v1"], params["g1"]).astype(jnp.bfloat16)
    w2 = wn(params["v2"], params["g2"]).astype(jnp.bfloat16)
    wd = params["wd"][:, :, 0].astype(jnp.bfloat16)

    def causal_conv(x, w, b):            # x: (N, C, L) bf16, w: (Cout, C, K) bf16
        xp = jnp.pad(x, ((0, 0), (0, 0), (pad, 0)))
        out = b[None, :, None].astype(jnp.float32)
        for i in range(K):
            out = out + jnp.einsum("ncl,oc->nol", xp[:, :, i * dil:i * dil + L],
                                   w[:, :, i], preferred_element_type=jnp.float32)
        return out

    lrelu = lambda z: jnp.where(z > 0, z, slope * z)
    xb = x_ncl.astype(jnp.bfloat16)
    h1 = lrelu(causal_conv(xb, w1, params["b1"]))
    h2 = lrelu(causal_conv(h1.astype(jnp.bfloat16), w2, params["b2"]))
    res = jnp.einsum("ncl,oc->nol", xb, wd,
                     preferred_element_type=jnp.float32) + params["bd"][None, :, None]
    return lrelu(h2 + res)


if __name__ == "__main__":
    # small shapes consistent with the module (n_inputs=4, n_outputs=8, k=3, dil=2)
    N, Cin, Cout, L = 2, 4, 8, 256
    K, dilation = 3, 2                    # padding = (K-1)*dilation = 4 (chomped)

    key = jax.random.PRNGKey(0)
    ks = jax.random.split(key, 8)
    v1 = 0.01 * jax.random.normal(ks[0], (Cout, Cin, K), jnp.float32)
    v2 = 0.01 * jax.random.normal(ks[1], (Cout, Cout, K), jnp.float32)
    g1 = jnp.sqrt(jnp.sum(v1 * v1, axis=(1, 2)))          # weight_norm init: g = ||v||
    g2 = jnp.sqrt(jnp.sum(v2 * v2, axis=(1, 2)))
    params = {
        "v1": v1, "g1": g1,
        "b1": 0.01 * jax.random.normal(ks[2], (Cout,), jnp.float32),
        "v2": v2, "g2": g2,
        "b2": 0.01 * jax.random.normal(ks[3], (Cout,), jnp.float32),
        "wd": 0.01 * jax.random.normal(ks[4], (Cout, Cin, 1), jnp.float32),
        "bd": 0.01 * jax.random.normal(ks[5], (Cout,), jnp.float32),
    }
    x = jax.random.normal(ks[6], (N, Cin, L), jnp.float32)

    # l_tile=128 (< L) so the sequential halo-carry path is exercised in the test.
    out = temporal_block_forward(x, params, kernel_size=K, dilation=dilation, l_tile=128)
    out = jax.block_until_ready(out)

    ref = temporal_block_reference(x, params, kernel_size=K, dilation=dilation)
    ref = jax.block_until_ready(ref)

    assert out.shape == (N, Cout, L), out.shape
    np.testing.assert_allclose(np.asarray(out), np.asarray(ref), rtol=5e-3, atol=5e-4)
    print("KERNEL_OK")
</pallas_src>

<mosaic_0001>
module attributes {stable_mosaic.version = 11 : i64} {
  func.func @kernel(%arg0: i32, %arg1: i32, %arg2: memref<1x4x128xbf16, #tpu.memory_space<vmem>>, %arg3: memref<16x12xbf16, #tpu.memory_space<vmem>>, %arg4: memref<16x1xf32, #tpu.memory_space<vmem>>, %arg5: memref<8x24xbf16, #tpu.memory_space<vmem>>, %arg6: memref<8x1xf32, #tpu.memory_space<vmem>>, %arg7: memref<1x8x128xf32, #tpu.memory_space<vmem>>, %arg8: memref<4x4xbf16, #tpu.memory_space<vmem>>, %arg9: memref<8x4xbf16, #tpu.memory_space<vmem>>) attributes {dimension_semantics = [#tpu.dimension_semantics<parallel>, #tpu.dimension_semantics<arbitrary>], iteration_bounds = array<i64: 2, 2>, scalar_prefetch = 0 : i64, scratch_operands = 2 : i64, tpu.core_type = #tpu.core_type<tc>, window_params = [{transform_indices = @transform_0, window_bounds = array<i64: 1, 4, 128>}, {pipeline_mode = #tpu.pipeline_mode<synchronous>, transform_indices = @transform_1, window_bounds = array<i64: 16, 12>}, {pipeline_mode = #tpu.pipeline_mode<synchronous>, transform_indices = @transform_2, window_bounds = array<i64: 16, 1>}, {pipeline_mode = #tpu.pipeline_mode<synchronous>, transform_indices = @transform_3, window_bounds = array<i64: 8, 24>}, {pipeline_mode = #tpu.pipeline_mode<synchronous>, transform_indices = @transform_4, window_bounds = array<i64: 8, 1>}, {transform_indices = @transform_5, window_bounds = array<i64: 1, 8, 128>}]} {
    %c0_i32 = arith.constant 0 : i32
    %0 = arith.cmpi eq, %arg1, %c0_i32 : i32
    %1 = arith.extui %0 : i1 to i32
    %c0_i32_0 = arith.constant 0 : i32
    %2 = arith.cmpi ne, %1, %c0_i32_0 : i32
    scf.if %2 {
      %cst_29 = arith.constant 0.000000e+00 : bf16
      %53 = vector.broadcast %cst_29 : bf16 to vector<4x4xbf16>
      %c0_30 = arith.constant 0 : index
      %c0_31 = arith.constant 0 : index
      %54 = vector.load %arg8[%c0_30, %c0_31] : memref<4x4xbf16, #tpu.memory_space<vmem>>, vector<4x4xbf16>
      tpu.vector_store %arg8[%c0_30, %c0_31], %53 {strides = array<i32>} : memref<4x4xbf16, #tpu.memory_space<vmem>>, vector<4x4xbf16>,
      %cst_32 = arith.constant 0.000000e+00 : bf16
      %55 = vector.broadcast %cst_32 : bf16 to vector<8x4xbf16>
      %c0_33 = arith.constant 0 : index
      %c0_34 = arith.constant 0 : index
      %56 = vector.load %arg9[%c0_33, %c0_34] : memref<8x4xbf16, #tpu.memory_space<vmem>>, vector<8x4xbf16>
      tpu.vector_store %arg9[%c0_33, %c0_34], %55 {strides = array<i32>} : memref<8x4xbf16, #tpu.memory_space<vmem>>, vector<8x4xbf16>,
    } else {
    }
    %c0 = arith.constant 0 : index
    %c0_1 = arith.constant 0 : index
    %c0_2 = arith.constant 0 : index
    %3 = vector.load %arg2[%c0, %c0_1, %c0_2] : memref<1x4x128xbf16, #tpu.memory_space<vmem>>, vector<1x4x128xbf16>
    %4 = vector.shape_cast %3 : vector<1x4x128xbf16> to vector<4x128xbf16>
    %c0_3 = arith.constant 0 : index
    %c0_4 = arith.constant 0 : index
    %5 = vector.load %arg8[%c0_3, %c0_4] : memref<4x4xbf16, #tpu.memory_space<vmem>>, vector<4x4xbf16>
    %6 = tpu.concatenate %5, %4 in 1 : vector<4x4xbf16>, vector<4x128xbf16> -> vector<4x132xbf16>
    %7 = vector.extract_strided_slice %6 {offsets = [0, 0], sizes = [4, 128], strides = [1, 1]} : vector<4x132xbf16> to vector<4x128xbf16>
    %8 = vector.extract_strided_slice %6 {offsets = [0, 2], sizes = [4, 128], strides = [1, 1]} : vector<4x132xbf16> to vector<4x128xbf16>
    %9 = vector.extract_strided_slice %6 {offsets = [0, 4], sizes = [4, 128], strides = [1, 1]} : vector<4x132xbf16> to vector<4x128xbf16>
    %10 = tpu.concatenate %7, %8, %9 in 0 : vector<4x128xbf16>, vector<4x128xbf16>, vector<4x128xbf16> -> vector<12x128xbf16>
    %c0_5 = arith.constant 0 : index
    %c0_6 = arith.constant 0 : index
    %11 = vector.load %arg3[%c0_5, %c0_6] : memref<16x12xbf16, #tpu.memory_space<vmem>>, vector<16x12xbf16>
    %cst = arith.constant dense<0.000000e+00> : vector<16x128xf32>
    %12 = tpu.matmul %11, %10, %cst {dimension_numbers = #tpu.dot_dimension_numbers<[1], [0], [0], [1], [0, 0, 1, 1], [], []>} : vector<16x12xbf16>, vector<12x128xbf16>, vector<16x128xf32> -> vector<16x128xf32>
    %c0_7 = arith.constant 0 : index
    %c0_8 = arith.constant 0 : index
    %13 = vector.load %arg4[%c0_7, %c0_8] : memref<16x1xf32, #tpu.memory_space<vmem>>, vector<16x1xf32>
    %14 = vector.broadcast %13 : vector<16x1xf32> to vector<16x128xf32>
    %15 = arith.addf %12, %14 : vector<16x128xf32>
    %16 = vector.extract_strided_slice %15 {offsets = [0, 0], sizes = [8, 128], strides = [1, 1]} : vector<16x128xf32> to vector<8x128xf32>
    %17 = vector.extract_strided_slice %15 {offsets = [8, 0], sizes = [8, 128], strides = [1, 1]} : vector<16x128xf32> to vector<8x128xf32>
    %cst_9 = arith.constant 0.000000e+00 : f32
    %18 = vector.broadcast %cst_9 : f32 to vector<8x128xf32>
    %19 = arith.cmpf ogt, %16, %18 : vector<8x128xf32>
    %cst_10 = arith.constant 0.00999999977 : f32
    %20 = vector.broadcast %cst_10 : f32 to vector<8x128xf32>
    %21 = arith.mulf %20, %16 : vector<8x128xf32>
    %22 = arith.select %19, %16, %21 : vector<8x128xi1>, vector<8x128xf32>
    %23 = arith.truncf %22 : vector<8x128xf32> to vector<8x128xbf16>
    %c0_11 = arith.constant 0 : index
    %c0_12 = arith.constant 0 : index
    %24 = vector.load %arg9[%c0_11, %c0_12] : memref<8x4xbf16, #tpu.memory_space<vmem>>, vector<8x4xbf16>
    %25 = tpu.concatenate %24, %23 in 1 : vector<8x4xbf16>, vector<8x128xbf16> -> vector<8x132xbf16>
    %26 = vector.extract_strided_slice %25 {offsets = [0, 0], sizes = [8, 128], strides = [1, 1]} : vector<8x132xbf16> to vector<8x128xbf16>
    %27 = vector.extract_strided_slice %25 {offsets = [0, 2], sizes = [8, 128], strides = [1, 1]} : vector<8x132xbf16> to vector<8x128xbf16>
    %28 = vector.extract_strided_slice %25 {offsets = [0, 4], sizes = [8, 128], strides = [1, 1]} : vector<8x132xbf16> to vector<8x128xbf16>
    %29 = tpu.concatenate %26, %27, %28 in 0 : vector<8x128xbf16>, vector<8x128xbf16>, vector<8x128xbf16> -> vector<24x128xbf16>
    %c0_13 = arith.constant 0 : index
    %c0_14 = arith.constant 0 : index
    %30 = vector.load %arg5[%c0_13, %c0_14] : memref<8x24xbf16, #tpu.memory_space<vmem>>, vector<8x24xbf16>
    %cst_15 = arith.constant dense<0.000000e+00> : vector<8x128xf32>
    %31 = tpu.matmul %30, %29, %cst_15 {dimension_numbers = #tpu.dot_dimension_numbers<[1], [0], [0], [1], [0, 0, 1, 1], [], []>} : vector<8x24xbf16>, vector<24x128xbf16>, vector<8x128xf32> -> vector<8x128xf32>
    %c0_16 = arith.constant 0 : index
    %c0_17 = arith.constant 0 : index
    %32 = vector.load %arg6[%c0_16, %c0_17] : memref<8x1xf32, #tpu.memory_space<vmem>>, vector<8x1xf32>
    %33 = vector.broadcast %32 : vector<8x1xf32> to vector<8x128xf32>
    %34 = arith.addf %31, %33 : vector<8x128xf32>
    %cst_18 = arith.constant 0.000000e+00 : f32
    %35 = vector.broadcast %cst_18 : f32 to vector<8x128xf32>
    %36 = arith.cmpf ogt, %34, %35 : vector<8x128xf32>
    %cst_19 = arith.constant 0.00999999977 : f32
    %37 = vector.broadcast %cst_19 : f32 to vector<8x128xf32>
    %38 = arith.mulf %37, %34 : vector<8x128xf32>
    %39 = arith.select %36, %34, %38 : vector<8x128xi1>, vector<8x128xf32>
    %40 = arith.addf %39, %17 : vector<8x128xf32>
    %cst_20 = arith.constant 0.000000e+00 : f32
    %41 = vector.broadcast %cst_20 : f32 to vector<8x128xf32>
    %42 = arith.cmpf ogt, %40, %41 : vector<8x128xf32>
    %cst_21 = arith.constant 0.00999999977 : f32
    %43 = vector.broadcast %cst_21 : f32 to vector<8x128xf32>
    %44 = arith.mulf %43, %40 : vector<8x128xf32>
    %45 = arith.select %42, %40, %44 : vector<8x128xi1>, vector<8x128xf32>
    %c0_22 = arith.constant 0 : index
    %c0_23 = arith.constant 0 : index
    %c0_24 = arith.constant 0 : index
    %46 = vector.load %arg7[%c0_22, %c0_23, %c0_24] : memref<1x8x128xf32, #tpu.memory_space<vmem>>, vector<1x8x128xf32>
    %47 = vector.shape_cast %46 : vector<1x8x128xf32> to vector<8x128xf32>
    %48 = vector.shape_cast %45 : vector<8x128xf32> to vector<1x8x128xf32>
    tpu.vector_store %arg7[%c0_22, %c0_23, %c0_24], %48 {strides = array<i32>} : memref<1x8x128xf32, #tpu.memory_space<vmem>>, vector<1x8x128xf32>,
    %49 = vector.extract_strided_slice %4 {offsets = [0, 124], sizes = [4, 4], strides = [1, 1]} : vector<4x128xbf16> to vector<4x4xbf16>
    %c0_25 = arith.constant 0 : index
    %c0_26 = arith.constant 0 : index
    %50 = vector.load %arg8[%c0_25, %c0_26] : memref<4x4xbf16, #tpu.memory_space<vmem>>, vector<4x4xbf16>
    tpu.vector_store %arg8[%c0_25, %c0_26], %49 {strides = array<i32>} : memref<4x4xbf16, #tpu.memory_space<vmem>>, vector<4x4xbf16>,
    %51 = vector.extract_strided_slice %23 {offsets = [0, 124], sizes = [8, 4], strides = [1, 1]} : vector<8x128xbf16> to vector<8x4xbf16>
    %c0_27 = arith.constant 0 : index
    %c0_28 = arith.constant 0 : index
    %52 = vector.load %arg9[%c0_27, %c0_28] : memref<8x4xbf16, #tpu.memory_space<vmem>>, vector<8x4xbf16>
    tpu.vector_store %arg9[%c0_27, %c0_28], %51 {strides = array<i32>} : memref<8x4xbf16, #tpu.memory_space<vmem>>, vector<8x4xbf16>,
    return
  }
  func.func @transform_0(%arg0: i32, %arg1: i32) -> (i32, i32, i32) {
    %c0_i32 = arith.constant 0 : i32
    %c0_i32_0 = arith.constant 0 : i32
    return %arg0, %c0_i32, %arg1 : i32, i32, i32
  }
  func.func @transform_1(%arg0: i32, %arg1: i32) -> (i32, i32) {
    %c0_i32 = arith.constant 0 : i32
    %c0_i32_0 = arith.constant 0 : i32
    %c0_i32_1 = arith.constant 0 : i32
    return %c0_i32, %c0_i32_0 : i32, i32
  }
  func.func @transform_2(%arg0: i32, %arg1: i32) -> (i32, i32) {
    %c0_i32 = arith.constant 0 : i32
    %c0_i32_0 = arith.constant 0 : i32
    %c0_i32_1 = arith.constant 0 : i32
    return %c0_i32, %c0_i32_0 : i32, i32
  }
  func.func @transform_3(%arg0: i32, %arg1: i32) -> (i32, i32) {
    %c0_i32 = arith.constant 0 : i32
    %c0_i32_0 = arith.constant 0 : i32
    %c0_i32_1 = arith.constant 0 : i32
    return %c0_i32, %c0_i32_0 : i32, i32
  }
  func.func @transform_4(%arg0: i32, %arg1: i32) -> (i32, i32) {
    %c0_i32 = arith.constant 0 : i32
    %c0_i32_0 = arith.constant 0 : i32
    %c0_i32_1 = arith.constant 0 : i32
    return %c0_i32, %c0_i32_0 : i32, i32
  }
  func.func @transform_5(%arg0: i32, %arg1: i32) -> (i32, i32, i32) {
    %c0_i32 = arith.constant 0 : i32
    %c0_i32_0 = arith.constant 0 : i32
    return %arg0, %c0_i32, %arg1 : i32, i32, i32
  }
}

</mosaic_0001>

<llo_original>
// kernel: tpu_custom_call.1
$region0: #{tpu_custom_call.1}
  #allocation0 [shape = 'u32[]', space=smem, size = 0x4, offset = 0x4, fixed_abs, tag = 'smem constant byte address 0x4 - core index']
  #allocation1 [shape = 'u32[144,128]{1,0:T(1,128)}', space=vmem, size = 0x12000, scoped, tag = 'internal scratch']
  #allocation2 [shape = 'bf16[4,4]{1,0:T(4,128)(2,1)}', space=vmem, size = 0x400, scoped, tag = 'scratch operand']
  #allocation3 [shape = 'bf16[8,4]{1,0:T(8,128)(2,1)}', space=vmem, size = 0x800, scoped, tag = 'scratch operand']
  %s0 = inlined_call_operand.vmem [shape: bf16[2,4,256], index: 0, kind: input, shape index: {}]
  %s1 = inlined_call_operand.vmem [shape: bf16[16,12], index: 1, kind: input, shape index: {}]
  %s2 = inlined_call_operand.vmem [shape: f32[16,1], index: 2, kind: input, shape index: {}]
  %s3 = inlined_call_operand.vmem [shape: bf16[8,24], index: 3, kind: input, shape index: {}]
  %s4 = inlined_call_operand.vmem [shape: f32[8,1], index: 4, kind: input, shape index: {}]
  %s5 = inlined_call_operand.hbm [shape: f32[2,8,256], index: 5, kind: output, shape index: {}]
  %s6 = sld [smem:[#allocation0]]
  $region57: #{tpu_custom_call.1} parent=0
    _
  %s8 = ssub.s32 1, %s6
  %s9 = scalar_select 0, %s8, %s6
  $region1: #{tpu_custom_call.1} parent=0
    #allocation4 [shape = 'u8[8192]{0}', space=vmem, size = 0x2000, scoped, tag = 'output window, operand 0']
    #allocation5 [shape = 's32[2]{0}', space=sflag, size = 0x8, scoped, tag = 'scoped memory for tpu_custom_call.1']
    %10 = vsyncpa [#allocation5], 0
    %s11 = scalar_lea.sflag [#allocation5], 1
    %12 = vsyncpa %s11, 0
    loop: start=0, step=1, limit=6
    $region2: #{tpu_custom_call.1} parent=1 // loop_pre_header
      _
    $region3: #{tpu_custom_call.1} parent=1 // loop_header
      %s14 = sphi 0, %s18
      %p15 = scmp.ge.s32.totalorder %s14, 6
      %s21 = sphi 0, %s33
      %s22 = sphi 0, %s29
      %s23 = sphi 0, %s21
      %s24 = sphi 0, %s22
      %s25 = sphi 0, %s23
      %s26 = sphi 0, %s24
      %s38 = sphi 0, %s40
      %s41 = sphi 0, %s38
      %s42 = sphi 0, %s41
      %s58 = sphi 0, %s42
      %s62 = sphi 0, %s62
      %s64 = sphi 0, %s62
      %s65 = sphi 0, %s64
      %s79 = sphi 0, %s65
      %s83 = sphi 0, %s83
      %s85 = sphi 0, %s83
      %s86 = sphi 0, %s85
      %s100 = sphi 0, %s86
      %s104 = sphi 0, %s104
      %s106 = sphi 0, %s104
      %s107 = sphi 0, %s106
      %s121 = sphi 0, %s107
      %s125 = sphi 0, %s125
      %s127 = sphi 0, %s125
      %s128 = sphi 0, %s127
      %s142 = sphi 0, %s128
      %s150 = sphi 0, %s152
      %s153 = sphi 0, %s150
      %s154 = sphi 0, %s153
      %s170 = sphi 0, %s154
    $region4: #{tpu_custom_call.1} parent=1 // loop_header_branch
      %17 = sbr.rel (%p15) target = $region8
    $region5: #{tpu_custom_call.1} parent=1 // loop_body
      %s19 = ssub.s32 %s14, 1
      %s20 = ssub.s32 %s14, 2
      %s27 = sadd.s32 1, %s22
      %p28 = scmp.ge.s32.totalorder %s27, 2
      %s29 = scalar_select %p28, 0, %s27
      %s30 = sadd.s32 1, %s21
      %s31 = scalar_select %p28, %s30, %s21
      %p32 = scmp.ge.s32.totalorder %s31, 2
      %s33 = scalar_select %p32, 0, %s31
      %s34 = ssub.s32 %s21, %s33
      %s35 = ssub.s32 %s22, %s29
      %s36 = sor.u32 %s34, %s35
      %p37 = scmp.eq.s32.totalorder %s36, 0
      %s39 = sadd.s32 %s38, 1
      %s40 = scalar_select %p37, %s38, %s39
      %p43 = pneg %p37
      %p44 = scmp.eq.s32.totalorder %s14, 3
      %p45 = por %p43, %p44
      %p46 = scmp.ne.s32.totalorder %s38, %s41
      %p47 = scmp.eq.s32.totalorder %s14, 0
      %p48 = por %p46, %p47
      %p49 = scmp.ne.s32.totalorder %s38, %s41
      %p50 = scmp.eq.s32.totalorder %s19, 3
      %p51 = por %p49, %p50
      %p52 = scmp.ne.s32.totalorder %s41, %s42
      %p53 = scmp.eq.s32.totalorder %s19, 0
      %p54 = por %p52, %p53
      %p55 = scmp.ne.s32.totalorder %s41, %s42
      %p56 = scmp.eq.s32.totalorder %s20, 3
      %p57 = por %p55, %p56
      %p59 = scmp.ne.s32.totalorder %s42, %s58
      %p60 = scmp.eq.s32.totalorder %s20, 0
      %p61 = por %p59, %p60
      %s63 = sadd.s32 %s62, 1
      %p66 = scmp.eq.s32.totalorder %s14, 3
      %p67 = scmp.ne.s32.totalorder %s62, %s64
      %p68 = scmp.eq.s32.totalorder %s14, 0
      %p69 = por %p67, %p68
      %p70 = scmp.ne.s32.totalorder %s62, %s64
      %p71 = scmp.eq.s32.totalorder %s19, 3
      %p72 = por %p70, %p71
      %p73 = scmp.ne.s32.totalorder %s64, %s65
      %p74 = scmp.eq.s32.totalorder %s19, 0
      %p75 = por %p73, %p74
      %p76 = scmp.ne.s32.totalorder %s64, %s65
      %p77 = scmp.eq.s32.totalorder %s20, 3
      %p78 = por %p76, %p77
      %p80 = scmp.ne.s32.totalorder %s65, %s79
      %p81 = scmp.eq.s32.totalorder %s20, 0
      %p82 = por %p80, %p81
      %s84 = sadd.s32 %s83, 1
      %p87 = scmp.eq.s32.totalorder %s14, 3
      %p88 = scmp.ne.s32.totalorder %s83, %s85
      %p89 = scmp.eq.s32.totalorder %s14, 0
      %p90 = por %p88, %p89
      %p91 = scmp.ne.s32.totalorder %s83, %s85
      %p92 = scmp.eq.s32.totalorder %s19, 3
      %p93 = por %p91, %p92
      %p94 = scmp.ne.s32.totalorder %s85, %s86
      %p95 = scmp.eq.s32.totalorder %s19, 0
      %p96 = por %p94, %p95
      %p97 = scmp.ne.s32.totalorder %s85, %s86
      %p98 = scmp.eq.s32.totalorder %s20, 3
      %p99 = por %p97, %p98
      %p101 = scmp.ne.s32.totalorder %s86, %s100
      %p102 = scmp.eq.s32.totalorder %s20, 0
      %p103 = por %p101, %p102
      %s105 = sadd.s32 %s104, 1
      %p108 = scmp.eq.s32.totalorder %s14, 3
      %p109 = scmp.ne.s32.totalorder %s104, %s106
      %p110 = scmp.eq.s32.totalorder %s14, 0
      %p111 = por %p109, %p110
      %p112 = scmp.ne.s32.totalorder %s104, %s106
      %p113 = scmp.eq.s32.totalorder %s19, 3
      %p114 = por %p112, %p113
      %p115 = scmp.ne.s32.totalorder %s106, %s107
      %p116 = scmp.eq.s32.totalorder %s19, 0
      %p117 = por %p115, %p116
      %p118 = scmp.ne.s32.totalorder %s106, %s107
      %p119 = scmp.eq.s32.totalorder %s20, 3
      %p120 = por %p118, %p119
      %p122 = scmp.ne.s32.totalorder %s107, %s121
      %p123 = scmp.eq.s32.totalorder %s20, 0
      %p124 = por %p122, %p123
      %s126 = sadd.s32 %s125, 1
      %p129 = scmp.eq.s32.totalorder %s14, 3
      %p130 = scmp.ne.s32.totalorder %s125, %s127
      %p131 = scmp.eq.s32.totalorder %s14, 0
      %p132 = por %p130, %p131
      %p133 = scmp.ne.s32.totalorder %s125, %s127
      %p134 = scmp.eq.s32.totalorder %s19, 3
      %p135 = por %p133, %p134
      %p136 = scmp.ne.s32.totalorder %s127, %s128
      %p137 = scmp.eq.s32.totalorder %s19, 0
      %p138 = por %p136, %p137
      %p139 = scmp.ne.s32.totalorder %s127, %s128
      %p140 = scmp.eq.s32.totalorder %s20, 3
      %p141 = por %p139, %p140
      %p143 = scmp.ne.s32.totalorder %s128, %s142
      %p144 = scmp.eq.s32.totalorder %s20, 0
      %p145 = por %p143, %p144
      %s146 = ssub.s32 %s21, %s33
      %s147 = ssub.s32 %s22, %s29
      %s148 = sor.u32 %s146, %s147
      %p149 = scmp.eq.s32.totalorder %s148, 0
      %s151 = sadd.s32 %s150, 1
      %s152 = scalar_select %p149, %s150, %s151
      %p155 = pneg %p149
      %p156 = scmp.eq.s32.totalorder %s14, 3
      %p157 = por %p155, %p156
      %p158 = scmp.ne.s32.totalorder %s150, %s153
      %p159 = scmp.eq.s32.totalorder %s14, 0
      %p160 = por %p158, %p159
      %p161 = scmp.ne.s32.totalorder %s150, %s153
      %p162 = scmp.eq.s32.totalorder %s19, 3
      %p163 = por %p161, %p162
      %p164 = scmp.ne.s32.totalorder %s153, %s154
      %p165 = scmp.eq.s32.totalorder %s19, 0
      %p166 = por %p164, %p165
      %p167 = scmp.ne.s32.totalorder %s153, %s154
      %p168 = scmp.eq.s32.totalorder %s20, 3
      %p169 = por %p167, %p168
      %p171 = scmp.ne.s32.totalorder %s154, %s170
      %p172 = scmp.eq.s32.totalorder %s20, 0
      %p173 = por %p171, %p172
      %p174 = scmp.le.s32.totalorder 1, %s14
      %p175 = scmp.lt.s32.totalorder %s14, 5
      %p176 = pnand %p174, %p175
      %p177 = pneg %p176
      // Predicated region
      $region9: #{tpu_custom_call.1} parent=5 // pred_check
        _
      $region10: #{tpu_custom_call.1} parent=5 // pred_check_branch
        %179 = sbr.rel (%p176) target = $region12
      $region11: #{tpu_custom_call.1} parent=5 // pred_region
        %s180 = ssub.s32 %s14, 1
        // Predicated region
        $region13: #{tpu_custom_call.1} parent=11 // pred_check
          %p181 = pneg %p75
        $region14: #{tpu_custom_call.1} parent=11 // pred_check_branch
          %183 = sbr.rel (%p181) target = $region16
        $region15: #{tpu_custom_call.1} parent=11 // pred_region
          _
        $region16: #{tpu_custom_call.1} parent=11 // pred_fallthru
          _
        // Predicated region
        $region17: #{tpu_custom_call.1} parent=11 // pred_check
          %p184 = pneg %p96
        $region18: #{tpu_custom_call.1} parent=11 // pred_check_branch
          %186 = sbr.rel (%p184) target = $region20
        $region19: #{tpu_custom_call.1} parent=11 // pred_region
          _
        $region20: #{tpu_custom_call.1} parent=11 // pred_fallthru
          _
        // Predicated region
        $region21: #{tpu_custom_call.1} parent=11 // pred_check
          %p187 = pneg %p117
        $region22: #{tpu_custom_call.1} parent=11 // pred_check_branch
          %189 = sbr.rel (%p187) target = $region24
        $region23: #{tpu_custom_call.1} parent=11 // pred_region
          _
        $region24: #{tpu_custom_call.1} parent=11 // pred_fallthru
          _
        // Predicated region
        $region25: #{tpu_custom_call.1} parent=11 // pred_check
          %p190 = pneg %p138
        $region26: #{tpu_custom_call.1} parent=11 // pred_check_branch
          %192 = sbr.rel (%p190) target = $region28
        $region27: #{tpu_custom_call.1} parent=11 // pred_region
          _
        $region28: #{tpu_custom_call.1} parent=11 // pred_fallthru
          _
      $region12: #{tpu_custom_call.1} parent=5 // pred_fallthru
        _
      %p193 = scmp.lt.s32.totalorder %s14, 4
      // Predicated region
      $region29: #{tpu_custom_call.1} parent=5 // pred_check
        %p194 = pneg %p193
      $region30: #{tpu_custom_call.1} parent=5 // pred_check_branch
        %196 = sbr.rel (%p194) target = $region32
      $region31: #{tpu_custom_call.1} parent=5 // pred_region
        // Predicated region
        $region33: #{tpu_custom_call.1} parent=31 // pred_check
          %p197 = pneg %p48
        $region34: #{tpu_custom_call.1} parent=31 // pred_check_branch
          %199 = sbr.rel (%p197) target = $region36
        $region35: #{tpu_custom_call.1} parent=31 // pred_region
          %p200 = scmp.lt.s32.totalorder %s21, 1
          %s201 = scalar_select %p200, %s21, 1
          %p202 = scmp.lt.s32.totalorder %s22, 1
          %s203 = scalar_select %p202, %s22, 1
          %s204 = smul.addr %s201, 2
          %s205 = sadd.s32 %s203, %s204
          %s206 = smul.addr %s205, 2
          %s207 = scalar_lea.vmem %s0, %s206
        $region36: #{tpu_custom_call.1} parent=31 // pred_fallthru
          _
      $region32: #{tpu_custom_call.1} parent=5 // pred_fallthru
        _
      %p208 = scmp.le.s32.totalorder 1, %s14
      %p209 = scmp.lt.s32.totalorder %s14, 5
      %p210 = pnand %p208, %p209
      %p211 = pneg %p210
      // Predicated region
      $region37: #{tpu_custom_call.1} parent=5 // pred_check
        _
      $region38: #{tpu_custom_call.1} parent=5 // pred_check_branch
        %213 = sbr.rel (%p210) target = $region40
      $region39: #{tpu_custom_call.1} parent=5 // pred_region
        %s214 = ssub.s32 %s14, 1
        %p215 = scmp.lt.s32.totalorder %s23, 1
        %s216 = scalar_select %p215, %s23, 1
        %p217 = scmp.lt.s32.totalorder %s24, 1
        %s218 = scalar_select %p217, %s24, 1
        %s219 = smul.addr %s216, 2
        %s220 = sadd.s32 %s218, %s219
        %s221 = smul.addr %s220, 2
        %s222 = scalar_lea.vmem %s0, %s221
        %p223 = pneg %p54
        %p224 = pneg %p51
        %p225 = pneg %p75
        %p226 = pneg %p72
        %p227 = pneg %p96
        %p228 = pneg %p93
        %p229 = pneg %p117
        %p230 = pneg %p114
        %p231 = pneg %p138
        %p232 = pneg %p135
        %p233 = pneg %p166
        %p234 = pneg %p163
        %s235 = sand.u32 %s153, 1
        %s236 = scalar_lea.sflag [#allocation5], %s235
        %s237 = sand.u32 %s153, 1
        %s238 = smul.addr %s237, 8
        %s239 = scalar_lea.vmem [#allocation4], %s238
        %p240 = scmp.lt.s32.totalorder %s23, 1
        %s241 = scalar_select %p240, %s23, 1
        %p242 = scmp.lt.s32.totalorder %s24, 1
        %s243 = scalar_select %p242, %s24, 1
        %s244 = smul.addr %s241, 2
        %s245 = sadd.s32 %s243, %s244
        %s246 = smul.addr %s245, 2
        %s247 = scalar_lea.vmem %s0, %s246
        %p249 = scmp.eq.s32.totalorder %s24, 0
        // Predicated region
        $region41: #{tpu_custom_call.1} parent=39 // pred_check
          %p250 = pneg %p249
        $region42: #{tpu_custom_call.1} parent=39 // pred_check_branch
          %252 = sbr.rel (%p250) target = $region44
        $region43: #{tpu_custom_call.1} parent=39 // pred_region
          %vm253 = vcmask 25600
          %254 = vst.msk [vmem:[#allocation2] sm:$0x3] %vm253, 0
          %vm255 = vcmask 27648
          %256 = vst.msk [vmem:[#allocation3] sm:$0xf] %vm255, 0
        $region44: #{tpu_custom_call.1} parent=39 // pred_fallthru
          _
        %v257 = vld [vmem:[%s247] sm:$0x3]
        %v258 = vld [vmem:[#allocation2] sm:$0x3]
        %v261 = vunpack.c.l.s4 1983009808
        %v262 = vunpack.c.0.s8 %v261
        %v263 = vlaneseq
        %v264 = vshrl.u32 %v263, 7
        %v265 = vsub.s32 %v262, %v264
        %v266 = vrot.slane %v257, %v265
        %267 = vrot.lane.b32.xlu0 %v266, 4
        %v268 = vpop.permute.xlu0 %267
        %vm269 = vcmask 31744
        %v272 = vsel %vm269, %v258, %v268
        %v274 = vrot.slane %v272, 6
        %v275 = vrot.slane %v268, 6
        %276 = vrot.lane.b32.xlu0 %v274, 126
        %v277 = vpop.permute.xlu0 %276
        %278 = vrot.lane.b32.xlu0 %v275, 126
        %v279 = vpop.permute.xlu0 %278
        %vm280 = vcmask 1031168
        %v281 = vsel %vm280, %v277, %v279
        %v282 = vrot.slane %v272, 4
        %v283 = vrot.slane %v268, 4
        %284 = vrot.lane.b32.xlu0 %v282, 124
        %v285 = vpop.permute.xlu0 %284
        %286 = vrot.lane.b32.xlu0 %v283, 124
        %v287 = vpop.permute.xlu0 %286
        %vm288 = vcmask 1014784
        %v289 = vsel %vm288, %v285, %v287
        %vm290 = vcmask 1041408
        %v292 = vsel %vm290, %v272, %v281
        %vm293 = vcmask 1043456
        %v295 = vsel %vm293, %v292, %v289
        %v296 = vld [vmem:[%s1] sm:$0xf]
        %v297 = vld [vmem:[%s1 + $0x4] sm:$0xf]
        %v298 = vld [vmem:[%s2] sm:$0xff]
        %v299 = vld [vmem:[%s2 + $0x8] sm:$0xff]
        %301 = vset.pattern.permute.xlu0 0
        %302 = vperm.xlu0 %301, %v298
        %v303 = vpop.permute.xlu0 %302
        %306 = vset.pattern.permute.xlu0 0
        %307 = vperm.xlu0 %306, %v299
        %v308 = vpop.permute.xlu0 %307
        %v312 = vunpack.c.l.b16 %v296
        %v313 = vunpack.c.l.b16 %v297
        %v314 = vpack.c.b16 %v313, %v312
        %vm315 = vcmask 97280
        %v317 = vsel %vm315, %v314, 0
        %vm319 = vcmask 1045504
        %v320 = vsel %vm319, %v295, 0
        %322 = vmatprep.subr.bf16.mxu0 0
        %323 = vmatpush1.bf16.msra.mxu0 %v320
        %324 = vmatprep.subr.bf16.mxu0 0
        %325 = vmatpush1.bf16.msra.mxu0 0
        %326 = vmatprep.subr.bf16.mxu0 0
        %327 = vmatpush1.bf16.msra.mxu0 0
        %328 = vmatprep.subr.bf16.mxu0 0
        %329 = vmatpush1.bf16.msra.mxu0 0
        %330 = vmatprep.subr.bf16.mxu0 0
        %331 = vmatpush1.bf16.msra.mxu0 0
        %332 = vmatprep.subr.bf16.mxu0 0
        %333 = vmatpush1.bf16.msra.mxu0 0
        %334 = vmatprep.subr.bf16.mxu0 0
        %335 = vmatpush1.bf16.msra.mxu0 0
        %336 = vmatprep.subr.bf16.mxu0 0
        %337 = vmatpush1.bf16.msra.mxu0 0
        %338 = vmatprep.subr.bf16.mxu0 0
        %339 = vmatpush1.bf16.msra.mxu0 0
        %340 = vmatprep.subr.bf16.mxu0 0
        %341 = vmatpush1.bf16.msra.mxu0 0
        %342 = vmatprep.subr.bf16.mxu0 0
        %343 = vmatpush1.bf16.msra.mxu0 0
        %344 = vmatprep.subr.bf16.mxu0 0
        %345 = vmatpush1.bf16.msra.mxu0 0
        %346 = vmatprep.subr.bf16.mxu0 0
        %347 = vmatpush1.bf16.msra.mxu0 0
        %348 = vmatprep.subr.bf16.mxu0 0
        %349 = vmatpush1.bf16.msra.mxu0 0
        %350 = vmatprep.subr.bf16.mxu0 0
        %351 = vmatpush1.bf16.msra.mxu0 0
        %352 = vmatprep.subr.bf16.mxu0 0
        %353 = vmatpush1.bf16.msra.mxu0 0
        %354 = vmatprep.mubr.bf16.mxu0 0
        %355 = vmatmul.mubr.bf16.gmra.mrb[0].mxu0 %v317
        %v356 = vpop.f32.mrb[0].mxu0
        %v357 = vadd.f32 %v303, %v356
        %v358 = vpop.f32.mrb[0].mxu0
        %v359 = vpop.f32.mrb[0].mxu0
        %v360 = vadd.f32 %v308, %v359
        %v361 = vpop.f32.mrb[0].mxu0
        %362 = vdwg.mxu0
        %vm363 = vcmp.gt.f32.partialorder %v357, 0.0
        %v364 = vmul.f32 %v357, 0.01
        %v365 = vsel %vm363, %v357, %v364
        %v366 = vpack.c.bf16 %v365, %v365
        %v367 = vld [vmem:[#allocation3] sm:$0xf]
        %369 = vrot.lane.b32.xlu0 %v366, 4
        %v370 = vpop.permute.xlu0 %369
        %v373 = vsel %vm269, %v367, %v370
        %v375 = vrot.slane %v373, 4
        %v376 = vrot.slane %v370, 4
        %377 = vrot.lane.b32.xlu0 %v375, 126
        %v378 = vpop.permute.xlu0 %377
        %379 = vrot.lane.b32.xlu0 %v376, 126
        %v380 = vpop.permute.xlu0 %379
        %v381 = vsel %vm280, %v378, %v380
        %382 = vrot.lane.b32.xlu0 %v373, 124
        %v383 = vpop.permute.xlu0 %382
        %384 = vrot.lane.b32.xlu0 %v370, 124
        %v385 = vpop.permute.xlu0 %384
        %v386 = vsel %vm288, %v383, %v385
        %v388 = vsel %vm293, %v373, %v381
        %v390 = vld [vmem:[%s3] sm:$0xf]
        %v391 = vld [vmem:[%s4] sm:$0xff]
        %393 = vset.pattern.permute.xlu0 0
        %394 = vperm.xlu0 %393, %v391
        %v395 = vpop.permute.xlu0 %394
        %vm397 = vcmask 195584
        %v399 = vsel %vm397, %v390, 0
        %v402 = vsel %vm293, %v386, 0
        %404 = vmatprep.subr.bf16.mxu0 0
        %405 = vmatpush1.bf16.msra.mxu0 %v388
        %406 = vmatprep.subr.bf16.mxu0 0
        %407 = vmatpush1.bf16.msra.mxu0 %v402
        %408 = vmatprep.subr.bf16.mxu0 0
        %409 = vmatpush1.bf16.msra.mxu0 0
        %410 = vmatprep.subr.bf16.mxu0 0
        %411 = vmatpush1.bf16.msra.mxu0 0
        %412 = vmatprep.subr.bf16.mxu0 0
        %413 = vmatpush1.bf16.msra.mxu0 0
        %414 = vmatprep.subr.bf16.mxu0 0
        %415 = vmatpush1.bf16.msra.mxu0 0
        %416 = vmatprep.subr.bf16.mxu0 0
        %417 = vmatpush1.bf16.msra.mxu0 0
        %418 = vmatprep.subr.bf16.mxu0 0
        %419 = vmatpush1.bf16.msra.mxu0 0
        %420 = vmatprep.subr.bf16.mxu0 0
        %421 = vmatpush1.bf16.msra.mxu0 0
        %422 = vmatprep.subr.bf16.mxu0 0
        %423 = vmatpush1.bf16.msra.mxu0 0
        %424 = vmatprep.subr.bf16.mxu0 0
        %425 = vmatpush1.bf16.msra.mxu0 0
        %426 = vmatprep.subr.bf16.mxu0 0
        %427 = vmatpush1.bf16.msra.mxu0 0
        %428 = vmatprep.subr.bf16.mxu0 0
        %429 = vmatpush1.bf16.msra.mxu0 0
        %430 = vmatprep.subr.bf16.mxu0 0
        %431 = vmatpush1.bf16.msra.mxu0 0
        %432 = vmatprep.subr.bf16.mxu0 0
        %433 = vmatpush1.bf16.msra.mxu0 0
        %434 = vmatprep.subr.bf16.mxu0 0
        %435 = vmatpush1.bf16.msra.mxu0 0
        %436 = vmatprep.mubr.bf16.mxu0 0
        %437 = vmatmul.mubr.bf16.gmra.mrb[0].mxu0 %v399
        %v438 = vpop.f32.mrb[0].mxu0
        %v439 = vadd.f32 %v395, %v438
        %v440 = vpop.f32.mrb[0].mxu0
        %v441 = vpop.f32.mrb[0].mxu0
        %v442 = vpop.f32.mrb[0].mxu0
        %443 = vdwg.mxu0
        %vm444 = vcmp.gt.f32.partialorder %v439, 0.0
        %v445 = vmul.f32 %v439, 0.01
        %v446 = vsel %vm444, %v439, %v445
        %v447 = vadd.f32 %v446, %v360
        %vm448 = vcmp.gt.f32.partialorder %v447, 0.0
        %v449 = vmul.f32 %v447, 0.01
        %v450 = vsel %vm448, %v447, %v449
        %451 = vst [vmem:[%s239] sm:$0xff] %v450
        %452 = vrot.lane.b32.xlu0 %v257, 4
        %v453 = vpop.permute.xlu0 %452
        %vm455 = vcmask 25600
        %456 = vst.msk [vmem:[#allocation2] sm:$0x3] %vm455, %v453
        %v457 = vunpack.c.l.b16 %v366
        %v458 = vpack.c.b16 %v457, %v457
        %459 = vrot.lane.b32.xlu0 %v458, 4
        %v460 = vpop.permute.xlu0 %459
        %vm462 = vcmask 27648
        %463 = vst.msk [vmem:[#allocation3] sm:$0xf] %vm462, %v460
        %s464 = sand.u32 %s153, 1
        %s465 = scalar_lea.sflag [#allocation5], %s464
        %s466 = sand.u32 %s153, 1
        %s467 = smul.addr %s466, 8
        %s468 = scalar_lea.vmem [#allocation4], %s467
        // Predicated region
        $region45: #{tpu_custom_call.1} parent=39 // pred_check
          %p469 = pneg %p163
        $region46: #{tpu_custom_call.1} parent=39 // pred_check_branch
          %471 = sbr.rel (%p469) target = $region48
        $region47: #{tpu_custom_call.1} parent=39 // pred_region
          %s473 = ssub.s32 128, 128
          %474 = vsyncadd %s465, %s473
          %s475 = smul.addr %s23, 2
          %s476 = sadd.s32 %s24, %s475
          %s477 = smul.addr %s476, 128
          %s478 = scalar_lea.hbm %s5, %s477
          %s480 = sshll.u32 %s468, 4
          %s481 = int_to_ptr.vmem [resolvable:$true] %s480
          %483 = dma.vmem_to_hbm [thread:$0]  %s481, 128, %s478, %s465
        $region48: #{tpu_custom_call.1} parent=39 // pred_fallthru
          _
      $region40: #{tpu_custom_call.1} parent=5 // pred_fallthru
        _
      %p484 = scmp.le.s32.totalorder 2, %s14
      // Predicated region
      $region49: #{tpu_custom_call.1} parent=5 // pred_check
        %p485 = pneg %p484
      $region50: #{tpu_custom_call.1} parent=5 // pred_check_branch
        %487 = sbr.rel (%p485) target = $region52
      $region51: #{tpu_custom_call.1} parent=5 // pred_region
        %s488 = ssub.s32 %s14, 2
        // Predicated region
        $region53: #{tpu_custom_call.1} parent=51 // pred_check
          %p489 = pneg %p169
        $region54: #{tpu_custom_call.1} parent=51 // pred_check_branch
          %491 = sbr.rel (%p489) target = $region56
        $region55: #{tpu_custom_call.1} parent=51 // pred_region
          %s492 = sand.u32 %s154, 1
          %s493 = scalar_lea.sflag [#allocation5], %s492
          %s494 = sand.u32 %s154, 1
          %s495 = smul.addr %s494, 8
          %s496 = scalar_lea.vmem [#allocation4], %s495
          %497 = dma.done %s493, 128
        $region56: #{tpu_custom_call.1} parent=51 // pred_fallthru
          _
      $region52: #{tpu_custom_call.1} parent=5 // pred_fallthru
        _
    $region6: #{tpu_custom_call.1} parent=1 // loop_footer
      %s18 = sadd.s32 1, %s14
    $region7: #{tpu_custom_call.1} parent=1 // loop_footer_branch
      %13 = sbr.rel target = $region3
    $region8: #{tpu_custom_call.1} parent=1 // loop_exit
      _
    %498 = vsyncpa [#allocation5], 1
    %s499 = scalar_lea.sflag [#allocation5], 1
    %500 = vsyncpa %s499, 1

</llo_original>
